<compile_context>
chip_gen: v5e
topology: v5e:2x2
jax: 0.10.0
libtpu: 0.0.40
codegen_flags: <defaults>
</compile_context>

<pallas_src>
import functools

import jax
import jax.numpy as jnp
from jax.experimental import pallas as pl
from jax.experimental.pallas import tpu as pltpu


# ------------------------------ Pallas kernel ------------------------------

def _ms_mlp_conv_kernel(x_ref, w1_ref, b1_ref, w2_ref, b2_ref, o_ref, *,
                        tau, v_th, res, unroll):
    # Block shapes: x/o = (T, tile_rows, C_eff), weights full, biases (1, C).
    T = x_ref.shape[0]
    rows, c_in = x_ref.shape[1], x_ref.shape[2]
    c_hid = w1_ref.shape[1]
    c_out = w2_ref.shape[1]

    inv_tau = jnp.float32(1.0 / tau)
    w1 = w1_ref[...]
    w2 = w2_ref[...]
    # Hoisted bias broadcasts: JAX does not CSE broadcast_in_dim, so adding the
    # (1, C) bias inside the (unrolled) T loop would re-emit a sublane
    # broadcast per iteration.
    b1 = jnp.broadcast_to(b1_ref[...], (rows, c_hid))       # f32
    b2 = jnp.broadcast_to(b2_ref[...], (rows, c_out))       # f32

    def step(t, carry):
        v1, v2 = carry
        x = x_ref[t].astype(jnp.float32)                    # (rows, c_in)

        # --- fc1_lif: charge v += (x - v)/tau ; fire v >= v_th ; hard reset ---
        v1 = v1 + (x - v1) * inv_tau
        f1 = v1 >= v_th
        s1 = f1.astype(w1.dtype)                            # exact 0/1 spikes
        v1 = jnp.where(f1, 0.0, v1)

        # --- fc1_conv (1x1) + fc1_bn (folded into w1/b1); MXU, f32 acc ---
        h = jnp.dot(s1, w1, preferred_element_type=jnp.float32) + b1

        if res:                                             # in == hidden
            h = x + h
            identity = h
        else:
            identity = x

        # --- fc2_lif ---
        v2 = v2 + (h - v2) * inv_tau
        f2 = v2 >= v_th
        s2 = f2.astype(w2.dtype)
        v2 = jnp.where(f2, 0.0, v2)

        # --- fc2_conv (1x1) + fc2_bn (folded) + residual ---
        y = jnp.dot(s2, w2, preferred_element_type=jnp.float32) + b2
        o_ref[t] = (y + identity).astype(o_ref.dtype)
        return v1, v2

    init = (jnp.zeros((rows, c_in), jnp.float32),           # fc1_lif membrane
            jnp.zeros((rows, c_hid), jnp.float32))          # fc2_lif membrane
    jax.lax.fori_loop(0, T, step, init, unroll=unroll)


# ------------------------------ wrapper / glue ------------------------------

def _round_up(x, m):
    return -(-x // m) * m


def _vmem_budget_bytes():
    """Per-chip VMEM budget for this kernel's working set."""
    kind = ""
    try:
        kind = jax.devices()[0].device_kind.lower()
    except Exception:
        pass
    if "v7" in kind:
        return 52 << 20            # v7x: 64 MiB physical per TensorCore
    if any(v in kind for v in ("v4", "v5", "v6")):
        return 96 << 20            # 128 MiB physical VMEM parts
    return 48 << 20                # unknown: stay conservative


def _choose_tile_rows(n_rows, bytes_per_row, fixed_bytes, budget_bytes, *,
                      min_tile=256, min_grid=4):
    """Tile rows: sublane-aligned, >= floor when data allows, prefer >= min_grid
    grid steps (v7x megacore pipelining), and fit the VMEM budget."""
    cap = (budget_bytes - fixed_bytes) // max(bytes_per_row, 1)
    cap = max(8, (cap // 8) * 8)
    desired = max(min_tile, _round_up(pl.cdiv(n_rows, min_grid), 8))
    tile = min(desired, cap, _round_up(n_rows, 8))
    return max(8, (tile // 8) * 8)


def ms_mlp_conv_pallas(x_tnc, w1, b1, w2, b2, *, res, tau=2.0, v_th=1.0,
                       tile_rows=None, lane_pack=None,
                       weight_dtype=jnp.bfloat16):
    """x_tnc: (T, N, C); w1: (C, Chid); b1: (Chid,); w2: (Chid, Cout); b2: (Cout,).

    BN already folded into w/b.  Weights are cast to `weight_dtype` (bf16 by
    default: spikes are exact 0/1, so only the weights round; acc stays f32).
    x may be f32 or bf16 -- LIF math is always done in f32 in-kernel.
    """
    T, N, C = x_tnc.shape
    Chid, Cout = w1.shape[1], w2.shape[1]
    assert w1.shape[0] == C and w2.shape[0] == Chid
    assert b1.shape[-1] == Chid and b2.shape[-1] == Cout
    assert Cout == C                      # final residual add requires this
    if res:
        assert Chid == C

    w1 = jnp.asarray(w1, weight_dtype)
    w2 = jnp.asarray(w2, weight_dtype)

    # Lane packing: for narrow C, pack P pixels per row so the lane dim is a
    # multiple of 128 (dense vregs, unmasked stores); 1x1 convs stay matmuls
    # via block-diagonal (kron) weights.
    if lane_pack is None:
        lane_pack = 1
        if C < 128 and 128 % C == 0 and N % (128 // C) == 0:
            lane_pack = 128 // C
    P = lane_pack
    assert N % P == 0

    n_rows = N // P
    c_in, c_hid, c_out = P * C, P * Chid, P * Cout

    x_p = x_tnc.reshape(T, n_rows, c_in)
    if P > 1:
        w1_p = jnp.kron(jnp.eye(P, dtype=w1.dtype), w1)     # (P*C,   P*Chid)
        w2_p = jnp.kron(jnp.eye(P, dtype=w2.dtype), w2)     # (P*Chid, P*Cout)
        b1_p = jnp.tile(jnp.asarray(b1, jnp.float32).reshape(-1), P).reshape(1, c_hid)
        b2_p = jnp.tile(jnp.asarray(b2, jnp.float32).reshape(-1), P).reshape(1, c_out)
    else:
        w1_p, w2_p = w1, w2
        b1_p = jnp.asarray(b1, jnp.float32).reshape(1, c_hid)
        b2_p = jnp.asarray(b2, jnp.float32).reshape(1, c_out)

    # --- VMEM accounting: double-buffered in/out blocks, weights (also
    # double-buffered by the pipeline), membranes, hoisted bias broadcasts and
    # the live temporaries of the unrolled T loop. ---
    unroll = T if T <= 8 else 4
    in_item = x_p.dtype.itemsize
    out_item = jnp.dtype(x_tnc.dtype).itemsize
    wbytes = (w1_p.size * w1_p.dtype.itemsize + w2_p.size * w2_p.dtype.itemsize
              + (b1_p.size + b2_p.size) * 4)
    bytes_per_row = (2 * T * (c_in * in_item + c_out * out_item)   # dbl-buffered x/out blocks
                     + (c_in + c_hid) * 4                          # LIF membranes (f32)
                     + (c_hid + c_out) * 4                         # hoisted bias broadcasts
                     + unroll * 3 * (c_in + c_hid) * 4)            # live temps per unrolled iter
    fixed_bytes = 2 * wbytes + (2 << 20)
    budget = _vmem_budget_bytes()

    if tile_rows is None:
        tile_rows = _choose_tile_rows(n_rows, bytes_per_row, fixed_bytes, budget)
    tile_rows = max(8, _round_up(tile_rows, 8))

    # Pad rows to a multiple of the tile (no tiny-divisor fallback tiles);
    # padded rows are independent garbage and are sliced off afterwards.
    n_rows_pad = _round_up(n_rows, tile_rows)
    if n_rows_pad > n_rows:
        x_p = jnp.pad(x_p, ((0, 0), (0, n_rows_pad - n_rows), (0, 0)))
    grid = (n_rows_pad // tile_rows,)

    need = tile_rows * bytes_per_row + fixed_bytes
    vmem_limit = int(min(budget, max(need, 32 << 20)))

    # TODO(synk): weight/bias in_specs could use pipeline_mode=pl.Buffered(1)
    # (constant index_map) to drop their second buffer; negligible at these C.

    kern = functools.partial(_ms_mlp_conv_kernel, tau=tau, v_th=v_th, res=res,
                             unroll=unroll)
    out_p = pl.pallas_call(
        kern,
        out_shape=jax.ShapeDtypeStruct((T, n_rows_pad, c_out), x_tnc.dtype),
        grid_spec=pltpu.PrefetchScalarGridSpec(
            num_scalar_prefetch=0,
            grid=grid,
            in_specs=[
                pl.BlockSpec((T, tile_rows, c_in), lambda i: (0, i, 0)),
                pl.BlockSpec((c_in, c_hid), lambda i: (0, 0)),
                pl.BlockSpec((1, c_hid), lambda i: (0, 0)),
                pl.BlockSpec((c_hid, c_out), lambda i: (0, 0)),
                pl.BlockSpec((1, c_out), lambda i: (0, 0)),
            ],
            out_specs=pl.BlockSpec((T, tile_rows, c_out), lambda i: (0, i, 0)),
        ),
        compiler_params=pltpu.CompilerParams(
            dimension_semantics=("parallel",),
            vmem_limit_bytes=vmem_limit),
    )(x_p, w1_p, b1_p, w2_p, b2_p)

    return out_p[:, :n_rows, :].reshape(T, N, Cout)


# ------------------------- parameter setup (glue) ---------------------------

def fold_conv_bn(w, b, gamma, beta, mean, var, eps=1e-5):
    """Fold inference-mode BatchNorm into a 1x1 conv expressed as x @ w + b."""
    s = gamma / jnp.sqrt(var + eps)
    return w * s[None, :], (b - mean) * s + beta


def make_params(key, c_in, c_hid, c_out):
    ks = jax.random.split(key, 12)
    # conv weights (PyTorch (Cout, Cin, 1, 1)) stored transposed as (Cin, Cout)
    w1 = jax.random.normal(ks[0], (c_in, c_hid), jnp.float32) * 0.3
    b1 = jax.random.normal(ks[1], (c_hid,), jnp.float32) * 0.1
    w2 = jax.random.normal(ks[2], (c_hid, c_out), jnp.float32) * 0.3
    b2 = jax.random.normal(ks[3], (c_out,), jnp.float32) * 0.1
    # BN params / running stats (inference mode)
    g1 = 1.0 + 0.1 * jax.random.normal(ks[4], (c_hid,), jnp.float32)
    be1 = 0.1 * jax.random.normal(ks[5], (c_hid,), jnp.float32)
    m1 = 0.1 * jax.random.normal(ks[6], (c_hid,), jnp.float32)
    v1 = jax.random.uniform(ks[7], (c_hid,), jnp.float32, minval=0.5, maxval=1.5)
    g2 = 1.0 + 0.1 * jax.random.normal(ks[8], (c_out,), jnp.float32)
    be2 = 0.1 * jax.random.normal(ks[9], (c_out,), jnp.float32)
    m2 = 0.1 * jax.random.normal(ks[10], (c_out,), jnp.float32)
    v2 = jax.random.uniform(ks[11], (c_out,), jnp.float32, minval=0.5, maxval=1.5)
    w1f, b1f = fold_conv_bn(w1, b1, g1, be1, m1, v1)
    w2f, b2f = fold_conv_bn(w2, b2, g2, be2, m2, v2)
    return w1f, b1f, w2f, b2f


# --------------------------- pure-JAX reference -----------------------------

def _lif_seq(x, tau=2.0, v_th=1.0):
    def step(v, xt):
        v = v + (xt - v) / tau
        s = (v >= v_th).astype(x.dtype)
        return jnp.where(s > 0, 0.0, v), s
    _, spikes = jax.lax.scan(step, jnp.zeros_like(x[0]), x)
    return spikes


def reference(x, w1, b1, w2, b2, *, res):
    s1 = _lif_seq(x)
    h = s1 @ w1 + b1
    if res:
        h = x + h
        identity = h
    else:
        identity = x
    s2 = _lif_seq(h)
    return s2 @ w2 + b2 + identity


# ---------------------------------- main -------------------------------------

if __name__ == "__main__":
    T, B, H, W = 4, 2, 8, 8
    C = 16
    N = B * H * W  # 128

    key = jax.random.PRNGKey(0)
    kx, kp1, kp2 = jax.random.split(key, 3)

    # PyTorch layout (T, B, C, H, W) -> kernel layout (T, N, C)
    x_nchw = 2.0 * jax.random.normal(kx, (T, B, C, H, W), jnp.float32)
    x_tnc = jnp.transpose(x_nchw, (0, 1, 3, 4, 2)).reshape(T, N, C)

    out = None
    for hidden, kparam in ((C, kp1), (2 * C, kp2)):   # res=True and res=False
        res = (hidden == C)
        w1f, b1f, w2f, b2f = make_params(kparam, C, hidden, C)

        # bf16 folded weights (the perf-relevant path); reference uses the same
        # rounded values so the comparison only sees f32-accumulation noise.
        w1b = w1f.astype(jnp.bfloat16)
        w2b = w2f.astype(jnp.bfloat16)

        out = jax.block_until_ready(
            ms_mlp_conv_pallas(x_tnc, w1b, b1f, w2b, b2f, res=res))

        ref = reference(x_tnc, w1b.astype(jnp.float32), b1f,
                        w2b.astype(jnp.float32), b2f, res=res)
        err = float(jnp.max(jnp.abs(out - ref)))
        assert jnp.allclose(out, ref, rtol=1e-3, atol=1e-3), (
            f"mismatch (res={res}): max abs err = {err}")

    # back to PyTorch layout (T, B, C, H, W) if a caller needs it
    _ = jnp.transpose(out.reshape(T, B, H, W, C), (0, 1, 4, 2, 3))

    # TODO(synk): training-mode BatchNorm statistics and the surrogate-gradient
    # backward of the LIF neurons are out of scope (forward/inference only).
    print("KERNEL_OK")
</pallas_src>

<mosaic_0001>
module attributes {stable_mosaic.version = 11 : i64} {
  func.func @_ms_mlp_conv_kernel(%arg0: i32, %arg1: memref<4x16x128xf32, #tpu.memory_space<vmem>>, %arg2: memref<128x128xbf16, #tpu.memory_space<vmem>>, %arg3: memref<1x128xf32, #tpu.memory_space<vmem>>, %arg4: memref<128x128xbf16, #tpu.memory_space<vmem>>, %arg5: memref<1x128xf32, #tpu.memory_space<vmem>>, %arg6: memref<4x16x128xf32, #tpu.memory_space<vmem>>) attributes {dimension_semantics = [#tpu.dimension_semantics<parallel>], iteration_bounds = array<i64: 1>, scalar_prefetch = 0 : i64, scratch_operands = 0 : i64, tpu.core_type = #tpu.core_type<tc>, window_params = [{transform_indices = @transform_0, window_bounds = array<i64: 4, 16, 128>}, {pipeline_mode = #tpu.pipeline_mode<synchronous>, transform_indices = @transform_1, window_bounds = array<i64: 128, 128>}, {pipeline_mode = #tpu.pipeline_mode<synchronous>, transform_indices = @transform_2, window_bounds = array<i64: 1, 128>}, {pipeline_mode = #tpu.pipeline_mode<synchronous>, transform_indices = @transform_3, window_bounds = array<i64: 128, 128>}, {pipeline_mode = #tpu.pipeline_mode<synchronous>, transform_indices = @transform_4, window_bounds = array<i64: 1, 128>}, {transform_indices = @transform_5, window_bounds = array<i64: 4, 16, 128>}]} {
    %c0 = arith.constant 0 : index
    %c0_0 = arith.constant 0 : index
    %0 = vector.load %arg2[%c0, %c0_0] : memref<128x128xbf16, #tpu.memory_space<vmem>>, vector<128x128xbf16>
    %c0_1 = arith.constant 0 : index
    %c0_2 = arith.constant 0 : index
    %1 = vector.load %arg4[%c0_1, %c0_2] : memref<128x128xbf16, #tpu.memory_space<vmem>>, vector<128x128xbf16>
    %c0_3 = arith.constant 0 : index
    %c0_4 = arith.constant 0 : index
    %2 = vector.load %arg3[%c0_3, %c0_4] : memref<1x128xf32, #tpu.memory_space<vmem>>, vector<1x128xf32>
    %3 = vector.shape_cast %2 : vector<1x128xf32> to vector<1x128xf32>
    %4 = vector.broadcast %3 : vector<1x128xf32> to vector<16x128xf32>
    %c0_5 = arith.constant 0 : index
    %c0_6 = arith.constant 0 : index
    %5 = vector.load %arg5[%c0_5, %c0_6] : memref<1x128xf32, #tpu.memory_space<vmem>>, vector<1x128xf32>
    %6 = vector.shape_cast %5 : vector<1x128xf32> to vector<1x128xf32>
    %7 = vector.broadcast %6 : vector<1x128xf32> to vector<16x128xf32>
    %cst = arith.constant 0.000000e+00 : f32
    %8 = vector.broadcast %cst : f32 to vector<16x128xf32>
    %cst_7 = arith.constant 0.000000e+00 : f32
    %9 = vector.broadcast %cst_7 : f32 to vector<16x128xf32>
    %cst_8 = arith.constant 5.000000e-01 : f32
    %c0_i32 = arith.constant 0 : i32
    %10 = arith.index_cast %c0_i32 : i32 to index
    %c0_9 = arith.constant 0 : index
    %c0_10 = arith.constant 0 : index
    %11 = vector.load %arg1[%10, %c0_9, %c0_10] : memref<4x16x128xf32, #tpu.memory_space<vmem>>, vector<1x16x128xf32>
    %12 = vector.shape_cast %11 : vector<1x16x128xf32> to vector<16x128xf32>
    %13 = arith.subf %12, %8 : vector<16x128xf32>
    %14 = vector.broadcast %cst_8 : f32 to vector<16x128xf32>
    %15 = arith.mulf %13, %14 : vector<16x128xf32>
    %16 = arith.addf %8, %15 : vector<16x128xf32>
    %cst_11 = arith.constant 1.000000e+00 : f32
    %17 = vector.broadcast %cst_11 : f32 to vector<16x128xf32>
    %18 = arith.cmpf oge, %16, %17 : vector<16x128xf32>
    %19 = arith.extui %18 : vector<16x128xi1> to vector<16x128xi32>
    %20 = arith.sitofp %19 : vector<16x128xi32> to vector<16x128xf32>
    %21 = arith.truncf %20 : vector<16x128xf32> to vector<16x128xbf16>
    %cst_12 = arith.constant 0.000000e+00 : f32
    %22 = vector.broadcast %cst_12 : f32 to vector<16x128xf32>
    %23 = arith.select %18, %22, %16 : vector<16x128xi1>, vector<16x128xf32>
    %cst_13 = arith.constant dense<0.000000e+00> : vector<16x128xf32>
    %24 = tpu.matmul %21, %0, %cst_13 {dimension_numbers = #tpu.dot_dimension_numbers<[1], [0], [0], [1], [0, 0, 1, 1], [], []>} : vector<16x128xbf16>, vector<128x128xbf16>, vector<16x128xf32> -> vector<16x128xf32>
    %25 = arith.addf %24, %4 : vector<16x128xf32>
    %26 = arith.addf %12, %25 : vector<16x128xf32>
    %27 = arith.subf %26, %9 : vector<16x128xf32>
    %28 = vector.broadcast %cst_8 : f32 to vector<16x128xf32>
    %29 = arith.mulf %27, %28 : vector<16x128xf32>
    %30 = arith.addf %9, %29 : vector<16x128xf32>
    %cst_14 = arith.constant 1.000000e+00 : f32
    %31 = vector.broadcast %cst_14 : f32 to vector<16x128xf32>
    %32 = arith.cmpf oge, %30, %31 : vector<16x128xf32>
    %33 = arith.extui %32 : vector<16x128xi1> to vector<16x128xi32>
    %34 = arith.sitofp %33 : vector<16x128xi32> to vector<16x128xf32>
    %35 = arith.truncf %34 : vector<16x128xf32> to vector<16x128xbf16>
    %cst_15 = arith.constant 0.000000e+00 : f32
    %36 = vector.broadcast %cst_15 : f32 to vector<16x128xf32>
    %37 = arith.select %32, %36, %30 : vector<16x128xi1>, vector<16x128xf32>
    %cst_16 = arith.constant dense<0.000000e+00> : vector<16x128xf32>
    %38 = tpu.matmul %35, %1, %cst_16 {dimension_numbers = #tpu.dot_dimension_numbers<[1], [0], [0], [1], [0, 0, 1, 1], [], []>} : vector<16x128xbf16>, vector<128x128xbf16>, vector<16x128xf32> -> vector<16x128xf32>
    %39 = arith.addf %38, %7 : vector<16x128xf32>
    %40 = arith.addf %39, %26 : vector<16x128xf32>
    %41 = arith.index_cast %c0_i32 : i32 to index
    %c0_17 = arith.constant 0 : index
    %c0_18 = arith.constant 0 : index
    %42 = vector.load %arg6[%41, %c0_17, %c0_18] : memref<4x16x128xf32, #tpu.memory_space<vmem>>, vector<1x16x128xf32>
    %43 = vector.shape_cast %42 : vector<1x16x128xf32> to vector<16x128xf32>
    %44 = vector.shape_cast %40 : vector<16x128xf32> to vector<1x16x128xf32>
    tpu.vector_store %arg6[%41, %c0_17, %c0_18], %44 {strides = array<i32>} : memref<4x16x128xf32, #tpu.memory_space<vmem>>, vector<1x16x128xf32>,
    %c1_i32 = arith.constant 1 : i32
    %45 = arith.index_cast %c1_i32 : i32 to index
    %c0_19 = arith.constant 0 : index
    %c0_20 = arith.constant 0 : index
    %46 = vector.load %arg1[%45, %c0_19, %c0_20] : memref<4x16x128xf32, #tpu.memory_space<vmem>>, vector<1x16x128xf32>
    %47 = vector.shape_cast %46 : vector<1x16x128xf32> to vector<16x128xf32>
    %48 = arith.subf %47, %23 : vector<16x128xf32>
    %49 = vector.broadcast %cst_8 : f32 to vector<16x128xf32>
    %50 = arith.mulf %48, %49 : vector<16x128xf32>
    %51 = arith.addf %23, %50 : vector<16x128xf32>
    %cst_21 = arith.constant 1.000000e+00 : f32
    %52 = vector.broadcast %cst_21 : f32 to vector<16x128xf32>
    %53 = arith.cmpf oge, %51, %52 : vector<16x128xf32>
    %54 = arith.extui %53 : vector<16x128xi1> to vector<16x128xi32>
    %55 = arith.sitofp %54 : vector<16x128xi32> to vector<16x128xf32>
    %56 = arith.truncf %55 : vector<16x128xf32> to vector<16x128xbf16>
    %cst_22 = arith.constant 0.000000e+00 : f32
    %57 = vector.broadcast %cst_22 : f32 to vector<16x128xf32>
    %58 = arith.select %53, %57, %51 : vector<16x128xi1>, vector<16x128xf32>
    %cst_23 = arith.constant dense<0.000000e+00> : vector<16x128xf32>
    %59 = tpu.matmul %56, %0, %cst_23 {dimension_numbers = #tpu.dot_dimension_numbers<[1], [0], [0], [1], [0, 0, 1, 1], [], []>} : vector<16x128xbf16>, vector<128x128xbf16>, vector<16x128xf32> -> vector<16x128xf32>
    %60 = arith.addf %59, %4 : vector<16x128xf32>
    %61 = arith.addf %47, %60 : vector<16x128xf32>
    %62 = arith.subf %61, %37 : vector<16x128xf32>
    %63 = vector.broadcast %cst_8 : f32 to vector<16x128xf32>
    %64 = arith.mulf %62, %63 : vector<16x128xf32>
    %65 = arith.addf %37, %64 : vector<16x128xf32>
    %cst_24 = arith.constant 1.000000e+00 : f32
    %66 = vector.broadcast %cst_24 : f32 to vector<16x128xf32>
    %67 = arith.cmpf oge, %65, %66 : vector<16x128xf32>
    %68 = arith.extui %67 : vector<16x128xi1> to vector<16x128xi32>
    %69 = arith.sitofp %68 : vector<16x128xi32> to vector<16x128xf32>
    %70 = arith.truncf %69 : vector<16x128xf32> to vector<16x128xbf16>
    %cst_25 = arith.constant 0.000000e+00 : f32
    %71 = vector.broadcast %cst_25 : f32 to vector<16x128xf32>
    %72 = arith.select %67, %71, %65 : vector<16x128xi1>, vector<16x128xf32>
    %cst_26 = arith.constant dense<0.000000e+00> : vector<16x128xf32>
    %73 = tpu.matmul %70, %1, %cst_26 {dimension_numbers = #tpu.dot_dimension_numbers<[1], [0], [0], [1], [0, 0, 1, 1], [], []>} : vector<16x128xbf16>, vector<128x128xbf16>, vector<16x128xf32> -> vector<16x128xf32>
    %74 = arith.addf %73, %7 : vector<16x128xf32>
    %75 = arith.addf %74, %61 : vector<16x128xf32>
    %76 = arith.index_cast %c1_i32 : i32 to index
    %c0_27 = arith.constant 0 : index
    %c0_28 = arith.constant 0 : index
    %77 = vector.load %arg6[%76, %c0_27, %c0_28] : memref<4x16x128xf32, #tpu.memory_space<vmem>>, vector<1x16x128xf32>
    %78 = vector.shape_cast %77 : vector<1x16x128xf32> to vector<16x128xf32>
    %79 = vector.shape_cast %75 : vector<16x128xf32> to vector<1x16x128xf32>
    tpu.vector_store %arg6[%76, %c0_27, %c0_28], %79 {strides = array<i32>} : memref<4x16x128xf32, #tpu.memory_space<vmem>>, vector<1x16x128xf32>,
    %c2_i32 = arith.constant 2 : i32
    %80 = arith.index_cast %c2_i32 : i32 to index
    %c0_29 = arith.constant 0 : index
    %c0_30 = arith.constant 0 : index
    %81 = vector.load %arg1[%80, %c0_29, %c0_30] : memref<4x16x128xf32, #tpu.memory_space<vmem>>, vector<1x16x128xf32>
    %82 = vector.shape_cast %81 : vector<1x16x128xf32> to vector<16x128xf32>
    %83 = arith.subf %82, %58 : vector<16x128xf32>
    %84 = vector.broadcast %cst_8 : f32 to vector<16x128xf32>
    %85 = arith.mulf %83, %84 : vector<16x128xf32>
    %86 = arith.addf %58, %85 : vector<16x128xf32>
    %cst_31 = arith.constant 1.000000e+00 : f32
    %87 = vector.broadcast %cst_31 : f32 to vector<16x128xf32>
    %88 = arith.cmpf oge, %86, %87 : vector<16x128xf32>
    %89 = arith.extui %88 : vector<16x128xi1> to vector<16x128xi32>
    %90 = arith.sitofp %89 : vector<16x128xi32> to vector<16x128xf32>
    %91 = arith.truncf %90 : vector<16x128xf32> to vector<16x128xbf16>
    %cst_32 = arith.constant 0.000000e+00 : f32
    %92 = vector.broadcast %cst_32 : f32 to vector<16x128xf32>
    %93 = arith.select %88, %92, %86 : vector<16x128xi1>, vector<16x128xf32>
    %cst_33 = arith.constant dense<0.000000e+00> : vector<16x128xf32>
    %94 = tpu.matmul %91, %0, %cst_33 {dimension_numbers = #tpu.dot_dimension_numbers<[1], [0], [0], [1], [0, 0, 1, 1], [], []>} : vector<16x128xbf16>, vector<128x128xbf16>, vector<16x128xf32> -> vector<16x128xf32>
    %95 = arith.addf %94, %4 : vector<16x128xf32>
    %96 = arith.addf %82, %95 : vector<16x128xf32>
    %97 = arith.subf %96, %72 : vector<16x128xf32>
    %98 = vector.broadcast %cst_8 : f32 to vector<16x128xf32>
    %99 = arith.mulf %97, %98 : vector<16x128xf32>
    %100 = arith.addf %72, %99 : vector<16x128xf32>
    %cst_34 = arith.constant 1.000000e+00 : f32
    %101 = vector.broadcast %cst_34 : f32 to vector<16x128xf32>
    %102 = arith.cmpf oge, %100, %101 : vector<16x128xf32>
    %103 = arith.extui %102 : vector<16x128xi1> to vector<16x128xi32>
    %104 = arith.sitofp %103 : vector<16x128xi32> to vector<16x128xf32>
    %105 = arith.truncf %104 : vector<16x128xf32> to vector<16x128xbf16>
    %cst_35 = arith.constant 0.000000e+00 : f32
    %106 = vector.broadcast %cst_35 : f32 to vector<16x128xf32>
    %107 = arith.select %102, %106, %100 : vector<16x128xi1>, vector<16x128xf32>
    %cst_36 = arith.constant dense<0.000000e+00> : vector<16x128xf32>
    %108 = tpu.matmul %105, %1, %cst_36 {dimension_numbers = #tpu.dot_dimension_numbers<[1], [0], [0], [1], [0, 0, 1, 1], [], []>} : vector<16x128xbf16>, vector<128x128xbf16>, vector<16x128xf32> -> vector<16x128xf32>
    %109 = arith.addf %108, %7 : vector<16x128xf32>
    %110 = arith.addf %109, %96 : vector<16x128xf32>
    %111 = arith.index_cast %c2_i32 : i32 to index
    %c0_37 = arith.constant 0 : index
    %c0_38 = arith.constant 0 : index
    %112 = vector.load %arg6[%111, %c0_37, %c0_38] : memref<4x16x128xf32, #tpu.memory_space<vmem>>, vector<1x16x128xf32>
    %113 = vector.shape_cast %112 : vector<1x16x128xf32> to vector<16x128xf32>
    %114 = vector.shape_cast %110 : vector<16x128xf32> to vector<1x16x128xf32>
    tpu.vector_store %arg6[%111, %c0_37, %c0_38], %114 {strides = array<i32>} : memref<4x16x128xf32, #tpu.memory_space<vmem>>, vector<1x16x128xf32>,
    %c3_i32 = arith.constant 3 : i32
    %115 = arith.index_cast %c3_i32 : i32 to index
    %c0_39 = arith.constant 0 : index
    %c0_40 = arith.constant 0 : index
    %116 = vector.load %arg1[%115, %c0_39, %c0_40] : memref<4x16x128xf32, #tpu.memory_space<vmem>>, vector<1x16x128xf32>
    %117 = vector.shape_cast %116 : vector<1x16x128xf32> to vector<16x128xf32>
    %118 = arith.subf %117, %93 : vector<16x128xf32>
    %119 = vector.broadcast %cst_8 : f32 to vector<16x128xf32>
    %120 = arith.mulf %118, %119 : vector<16x128xf32>
    %121 = arith.addf %93, %120 : vector<16x128xf32>
    %cst_41 = arith.constant 1.000000e+00 : f32
    %122 = vector.broadcast %cst_41 : f32 to vector<16x128xf32>
    %123 = arith.cmpf oge, %121, %122 : vector<16x128xf32>
    %124 = arith.extui %123 : vector<16x128xi1> to vector<16x128xi32>
    %125 = arith.sitofp %124 : vector<16x128xi32> to vector<16x128xf32>
    %126 = arith.truncf %125 : vector<16x128xf32> to vector<16x128xbf16>
    %cst_42 = arith.constant 0.000000e+00 : f32
    %127 = vector.broadcast %cst_42 : f32 to vector<16x128xf32>
    %128 = arith.select %123, %127, %121 : vector<16x128xi1>, vector<16x128xf32>
    %cst_43 = arith.constant dense<0.000000e+00> : vector<16x128xf32>
    %129 = tpu.matmul %126, %0, %cst_43 {dimension_numbers = #tpu.dot_dimension_numbers<[1], [0], [0], [1], [0, 0, 1, 1], [], []>} : vector<16x128xbf16>, vector<128x128xbf16>, vector<16x128xf32> -> vector<16x128xf32>
    %130 = arith.addf %129, %4 : vector<16x128xf32>
    %131 = arith.addf %117, %130 : vector<16x128xf32>
    %132 = arith.subf %131, %107 : vector<16x128xf32>
    %133 = vector.broadcast %cst_8 : f32 to vector<16x128xf32>
    %134 = arith.mulf %132, %133 : vector<16x128xf32>
    %135 = arith.addf %107, %134 : vector<16x128xf32>
    %cst_44 = arith.constant 1.000000e+00 : f32
    %136 = vector.broadcast %cst_44 : f32 to vector<16x128xf32>
    %137 = arith.cmpf oge, %135, %136 : vector<16x128xf32>
    %138 = arith.extui %137 : vector<16x128xi1> to vector<16x128xi32>
    %139 = arith.sitofp %138 : vector<16x128xi32> to vector<16x128xf32>
    %140 = arith.truncf %139 : vector<16x128xf32> to vector<16x128xbf16>
    %cst_45 = arith.constant 0.000000e+00 : f32
    %141 = vector.broadcast %cst_45 : f32 to vector<16x128xf32>
    %142 = arith.select %137, %141, %135 : vector<16x128xi1>, vector<16x128xf32>
    %cst_46 = arith.constant dense<0.000000e+00> : vector<16x128xf32>
    %143 = tpu.matmul %140, %1, %cst_46 {dimension_numbers = #tpu.dot_dimension_numbers<[1], [0], [0], [1], [0, 0, 1, 1], [], []>} : vector<16x128xbf16>, vector<128x128xbf16>, vector<16x128xf32> -> vector<16x128xf32>
    %144 = arith.addf %143, %7 : vector<16x128xf32>
    %145 = arith.addf %144, %131 : vector<16x128xf32>
    %146 = arith.index_cast %c3_i32 : i32 to index
    %c0_47 = arith.constant 0 : index
    %c0_48 = arith.constant 0 : index
    %147 = vector.load %arg6[%146, %c0_47, %c0_48] : memref<4x16x128xf32, #tpu.memory_space<vmem>>, vector<1x16x128xf32>
    %148 = vector.shape_cast %147 : vector<1x16x128xf32> to vector<16x128xf32>
    %149 = vector.shape_cast %145 : vector<16x128xf32> to vector<1x16x128xf32>
    tpu.vector_store %arg6[%146, %c0_47, %c0_48], %149 {strides = array<i32>} : memref<4x16x128xf32, #tpu.memory_space<vmem>>, vector<1x16x128xf32>,
    %c4_i32 = arith.constant 4 : i32
    return
  }
  func.func @transform_0(%arg0: i32) -> (i32, i32, i32) {
    %c0_i32 = arith.constant 0 : i32
    %c0_i32_0 = arith.constant 0 : i32
    %c0_i32_1 = arith.constant 0 : i32
    return %c0_i32, %arg0, %c0_i32_0 : i32, i32, i32
  }
  func.func @transform_1(%arg0: i32) -> (i32, i32) {
    %c0_i32 = arith.constant 0 : i32
    %c0_i32_0 = arith.constant 0 : i32
    %c0_i32_1 = arith.constant 0 : i32
    return %c0_i32, %c0_i32_0 : i32, i32
  }
  func.func @transform_2(%arg0: i32) -> (i32, i32) {
    %c0_i32 = arith.constant 0 : i32
    %c0_i32_0 = arith.constant 0 : i32
    %c0_i32_1 = arith.constant 0 : i32
    return %c0_i32, %c0_i32_0 : i32, i32
  }
  func.func @transform_3(%arg0: i32) -> (i32, i32) {
    %c0_i32 = arith.constant 0 : i32
    %c0_i32_0 = arith.constant 0 : i32
    %c0_i32_1 = arith.constant 0 : i32
    return %c0_i32, %c0_i32_0 : i32, i32
  }
  func.func @transform_4(%arg0: i32) -> (i32, i32) {
    %c0_i32 = arith.constant 0 : i32
    %c0_i32_0 = arith.constant 0 : i32
    %c0_i32_1 = arith.constant 0 : i32
    return %c0_i32, %c0_i32_0 : i32, i32
  }
  func.func @transform_5(%arg0: i32) -> (i32, i32, i32) {
    %c0_i32 = arith.constant 0 : i32
    %c0_i32_0 = arith.constant 0 : i32
    %c0_i32_1 = arith.constant 0 : i32
    return %c0_i32, %arg0, %c0_i32_0 : i32, i32, i32
  }
}

</mosaic_0001>

<llo_original>
// kernel: tpu_custom_call.1
$region0: #{tpu_custom_call.1}
  #allocation0 [shape = 'u32[]', space=smem, size = 0x4, offset = 0x4, fixed_abs, tag = 'smem constant byte address 0x4 - core index']
  #allocation1 [shape = 'u32[72,128]{1,0:T(1,128)}', space=vmem, size = 0x9000, scoped, tag = 'internal scratch']
  %s0 = inlined_call_operand.hbm [shape: f32[4,16,128], index: 0, kind: input, shape index: {}]
  %s1 = inlined_call_operand.hbm [shape: bf16[128,128], index: 1, kind: input, shape index: {}]
  %s2 = inlined_call_operand.vmem [shape: f32[1,128], index: 2, kind: input, shape index: {}]
  %s3 = inlined_call_operand.hbm [shape: bf16[128,128], index: 3, kind: input, shape index: {}]
  %s4 = inlined_call_operand.vmem [shape: f32[1,128], index: 4, kind: input, shape index: {}]
  %s5 = inlined_call_operand.hbm [shape: f32[4,16,128], index: 5, kind: output, shape index: {}]
  %s6 = sld [smem:[#allocation0]]
  $region42: #{tpu_custom_call.1} parent=0
    _
  %s8 = ssub.s32 1, %s6
  %s9 = scalar_select 0, %s8, %s6
  $region1: #{tpu_custom_call.1} parent=0
    #allocation2 [shape = 'u8[32768]{0}', space=vmem, size = 0x8000, scoped, tag = 'input window, operand 0, single buffered']
    #allocation3 [shape = 's32[1]{0}', space=sflag, size = 0x4, scoped, tag = 'scoped memory for tpu_custom_call.1']
    #allocation4 [shape = 's32[1]{0}', space=sflag, size = 0x4, scoped, tag = 'scoped memory for tpu_custom_call.1']
    #allocation5 [shape = 'u8[32768]{0}', space=vmem, size = 0x8000, scoped, tag = 'input window, operand 1, single buffered']
    #allocation6 [shape = 's32[1]{0}', space=sflag, size = 0x4, scoped, tag = 'scoped memory for tpu_custom_call.1']
    #allocation7 [shape = 'u8[32768]{0}', space=vmem, size = 0x8000, scoped, tag = 'input window, operand 3, single buffered']
    #allocation8 [shape = 'u8[32768]{0}', space=vmem, size = 0x8000, scoped, tag = 'output window, operand 0, single buffered']
    %10 = vsyncpa [#allocation3], 0
    %11 = vsyncpa [#allocation6], 0
    %12 = vsyncpa [#allocation4], 0
    // Predicated region
    $region2: #{tpu_custom_call.1} parent=1 // pred_check
      _
    $region3: #{tpu_custom_call.1} parent=1 // pred_check_branch
      %14 = sbr.rel (0) target = $region5
    $region4: #{tpu_custom_call.1} parent=1 // pred_region
      %16 = vsyncadd [#allocation3], 0
      %s17 = sshll.u32 %s0, 4
      %s18 = int_to_ptr.hbm [resolvable:$true] %s17
      %s19 = sshll.u32 [#allocation2], 4
      %s20 = int_to_ptr.vmem [resolvable:$true] %s19
      %25 = dma.hbm_to_vmem [thread:$0]  %s18, 1024, %s20, [#allocation3], 128, 128, 8
    $region5: #{tpu_custom_call.1} parent=1 // pred_fallthru
      _
    // Predicated region
    $region6: #{tpu_custom_call.1} parent=1 // pred_check
      _
    $region7: #{tpu_custom_call.1} parent=1 // pred_check_branch
      %27 = sbr.rel (0) target = $region9
    $region8: #{tpu_custom_call.1} parent=1 // pred_region
      %29 = vsyncadd [#allocation6], 0
      %s30 = sshll.u32 %s1, 4
      %s31 = int_to_ptr.hbm [resolvable:$true] %s30
      %s32 = sshll.u32 [#allocation5], 4
      %s33 = int_to_ptr.vmem [resolvable:$true] %s32
      %38 = dma.hbm_to_vmem [thread:$0]  %s31, 1024, %s33, [#allocation6], 64, 64, 4
    $region9: #{tpu_custom_call.1} parent=1 // pred_fallthru
      _
    // Predicated region
    $region10: #{tpu_custom_call.1} parent=1 // pred_check
      _
    $region11: #{tpu_custom_call.1} parent=1 // pred_check_branch
      %40 = sbr.rel (0) target = $region13
    $region12: #{tpu_custom_call.1} parent=1 // pred_region
      _
    $region13: #{tpu_custom_call.1} parent=1 // pred_fallthru
      _
    // Predicated region
    $region14: #{tpu_custom_call.1} parent=1 // pred_check
      _
    $region15: #{tpu_custom_call.1} parent=1 // pred_check_branch
      %42 = sbr.rel (0) target = $region17
    $region16: #{tpu_custom_call.1} parent=1 // pred_region
      %44 = vsyncadd [#allocation6], 0
      %s45 = sshll.u32 %s3, 4
      %s46 = int_to_ptr.hbm [resolvable:$true] %s45
      %s47 = sshll.u32 [#allocation7], 4
      %s48 = int_to_ptr.vmem [resolvable:$true] %s47
      %53 = dma.hbm_to_vmem [thread:$0]  %s46, 1024, %s48, [#allocation6], 64, 64, 4
    $region17: #{tpu_custom_call.1} parent=1 // pred_fallthru
      _
    // Predicated region
    $region18: #{tpu_custom_call.1} parent=1 // pred_check
      _
    $region19: #{tpu_custom_call.1} parent=1 // pred_check_branch
      %55 = sbr.rel (0) target = $region21
    $region20: #{tpu_custom_call.1} parent=1 // pred_region
      _
    $region21: #{tpu_custom_call.1} parent=1 // pred_fallthru
      _
    // Predicated region
    $region22: #{tpu_custom_call.1} parent=1 // pred_check
      _
    $region23: #{tpu_custom_call.1} parent=1 // pred_check_branch
      %57 = sbr.rel (0) target = $region25
    $region24: #{tpu_custom_call.1} parent=1 // pred_region
      %59 = dma.done [#allocation3], 1024
    $region25: #{tpu_custom_call.1} parent=1 // pred_fallthru
      _
    // Predicated region
    $region26: #{tpu_custom_call.1} parent=1 // pred_check
      _
    $region27: #{tpu_custom_call.1} parent=1 // pred_check_branch
      %61 = sbr.rel (0) target = $region29
    $region28: #{tpu_custom_call.1} parent=1 // pred_region
      %63 = dma.done [#allocation6], 1024
    $region29: #{tpu_custom_call.1} parent=1 // pred_fallthru
      _
    // Predicated region
    $region30: #{tpu_custom_call.1} parent=1 // pred_check
      _
    $region31: #{tpu_custom_call.1} parent=1 // pred_check_branch
      %65 = sbr.rel (0) target = $region33
    $region32: #{tpu_custom_call.1} parent=1 // pred_region
      %67 = dma.done [#allocation6], 1024
    $region33: #{tpu_custom_call.1} parent=1 // pred_fallthru
      _
    %v68 = vld [vmem:[#allocation5] sm:$0xf]
    %v69 = vld [vmem:[#allocation5 + $0x4] sm:$0xf]
    %v70 = vld [vmem:[#allocation5 + $0x8] sm:$0xf]
    %v71 = vld [vmem:[#allocation5 + $0xc] sm:$0xf]
    %v72 = vld [vmem:[#allocation5 + $0x10] sm:$0xf]
    %v73 = vld [vmem:[#allocation5 + $0x14] sm:$0xf]
    %v74 = vld [vmem:[#allocation5 + $0x18] sm:$0xf]
    %v75 = vld [vmem:[#allocation5 + $0x1c] sm:$0xf]
    %v76 = vld [vmem:[#allocation5 + $0x20] sm:$0xf]
    %v77 = vld [vmem:[#allocation5 + $0x24] sm:$0xf]
    %v78 = vld [vmem:[#allocation5 + $0x28] sm:$0xf]
    %v79 = vld [vmem:[#allocation5 + $0x2c] sm:$0xf]
    %v80 = vld [vmem:[#allocation5 + $0x30] sm:$0xf]
    %v81 = vld [vmem:[#allocation5 + $0x34] sm:$0xf]
    %v82 = vld [vmem:[#allocation5 + $0x38] sm:$0xf]
    %v83 = vld [vmem:[#allocation5 + $0x3c] sm:$0xf]
    %v84 = vld [vmem:[#allocation7] sm:$0xf]
    %v85 = vld [vmem:[#allocation7 + $0x4] sm:$0xf]
    %v86 = vld [vmem:[#allocation7 + $0x8] sm:$0xf]
    %v87 = vld [vmem:[#allocation7 + $0xc] sm:$0xf]
    %v88 = vld [vmem:[#allocation7 + $0x10] sm:$0xf]
    %v89 = vld [vmem:[#allocation7 + $0x14] sm:$0xf]
    %v90 = vld [vmem:[#allocation7 + $0x18] sm:$0xf]
    %v91 = vld [vmem:[#allocation7 + $0x1c] sm:$0xf]
    %v92 = vld [vmem:[#allocation7 + $0x20] sm:$0xf]
    %v93 = vld [vmem:[#allocation7 + $0x24] sm:$0xf]
    %v94 = vld [vmem:[#allocation7 + $0x28] sm:$0xf]
    %v95 = vld [vmem:[#allocation7 + $0x2c] sm:$0xf]
    %v96 = vld [vmem:[#allocation7 + $0x30] sm:$0xf]
    %v97 = vld [vmem:[#allocation7 + $0x34] sm:$0xf]
    %v98 = vld [vmem:[#allocation7 + $0x38] sm:$0xf]
    %v99 = vld [vmem:[#allocation7 + $0x3c] sm:$0xf]
    %v100 = vld [vmem:[%s2] sm:$0x1]
    %v102 = vperm.slane %v100, 0
    %v104 = vld [vmem:[%s4] sm:$0x1]
    %v106 = vperm.slane %v104, 0
    %v108 = vld [vmem:[#allocation2] sm:$0xff]
    %v109 = vld [vmem:[#allocation2 + $0x8] sm:$0xff]
    %v110 = vmul.f32 %v108, 0.5
    %v111 = vmul.f32 %v109, 0.5
    %v112 = vadd.f32 %v110, 0.0
    %v113 = vadd.f32 %v111, 0.0
    %vm114 = vcmp.ge.f32.partialorder %v112, 1.0
    %vm115 = vcmp.ge.f32.partialorder %v113, 1.0
    %v116 = vsel %vm114, 1, 0
    %v117 = vsel %vm115, 1, 0
    %v118 = vcvt.s32.f32 %v116
    %v119 = vcvt.s32.f32 %v117
    %v120 = vpack.c.bf16 %v119, %v118
    %v121 = vsel %vm114, 0.0, %v112
    %v122 = vsel %vm115, 0.0, %v113
    %v139 = vunpack.c.l.b16 %v68
    %v140 = vunpack.c.l.b16 %v69
    %v141 = vunpack.c.l.b16 %v70
    %v142 = vunpack.c.l.b16 %v71
    %v143 = vunpack.c.l.b16 %v72
    %v144 = vunpack.c.l.b16 %v73
    %v145 = vunpack.c.l.b16 %v74
    %v146 = vunpack.c.l.b16 %v75
    %v147 = vunpack.c.l.b16 %v76
    %v148 = vunpack.c.l.b16 %v77
    %v149 = vunpack.c.l.b16 %v78
    %v150 = vunpack.c.l.b16 %v79
    %v151 = vunpack.c.l.b16 %v80
    %v152 = vunpack.c.l.b16 %v81
    %v153 = vunpack.c.l.b16 %v82
    %v154 = vunpack.c.l.b16 %v83
    %v155 = vpack.c.b16 %v140, %v139
    %v156 = vpack.c.b16 %v142, %v141
    %v157 = vpack.c.b16 %v144, %v143
    %v158 = vpack.c.b16 %v146, %v145
    %v159 = vpack.c.b16 %v148, %v147
    %v160 = vpack.c.b16 %v150, %v149
    %v161 = vpack.c.b16 %v152, %v151
    %v162 = vpack.c.b16 %v154, %v153
    %171 = vmatpush.bf16.msra.mxu0 %v162
    %172 = vmatpush.bf16.msra.mxu0 %v161
    %173 = vmatpush.bf16.msra.mxu0 %v160
    %174 = vmatpush.bf16.msra.mxu0 %v159
    %175 = vmatpush.bf16.msra.mxu0 %v158
    %176 = vmatpush.bf16.msra.mxu0 %v157
    %177 = vmatpush.bf16.msra.mxu0 %v156
    %178 = vmatpush.bf16.msra.mxu0 %v155
    %179 = vmatmul.bf16.gmra.mxu0 %v120
    %v180 = vpop.f32.mrf.mxu0
    %v181 = vadd.f32 %v102, %v180
    %v182 = vpop.f32.mrf.mxu0
    %v183 = vadd.f32 %v102, %v182
    %184 = vdwg.mxu0
    %v185 = vadd.f32 %v108, %v181
    %v186 = vadd.f32 %v109, %v183
    %v187 = vmul.f32 %v185, 0.5
    %v188 = vmul.f32 %v186, 0.5
    %v189 = vadd.f32 %v187, 0.0
    %v190 = vadd.f32 %v188, 0.0
    %vm191 = vcmp.ge.f32.partialorder %v189, 1.0
    %vm192 = vcmp.ge.f32.partialorder %v190, 1.0
    %v193 = vsel %vm191, 1, 0
    %v194 = vsel %vm192, 1, 0
    %v195 = vcvt.s32.f32 %v193
    %v196 = vcvt.s32.f32 %v194
    %v197 = vpack.c.bf16 %v196, %v195
    %v198 = vsel %vm191, 0.0, %v189
    %v199 = vsel %vm192, 0.0, %v190
    %v216 = vunpack.c.l.b16 %v84
    %v217 = vunpack.c.l.b16 %v85
    %v218 = vunpack.c.l.b16 %v86
    %v219 = vunpack.c.l.b16 %v87
    %v220 = vunpack.c.l.b16 %v88
    %v221 = vunpack.c.l.b16 %v89
    %v222 = vunpack.c.l.b16 %v90
    %v223 = vunpack.c.l.b16 %v91
    %v224 = vunpack.c.l.b16 %v92
    %v225 = vunpack.c.l.b16 %v93
    %v226 = vunpack.c.l.b16 %v94
    %v227 = vunpack.c.l.b16 %v95
    %v228 = vunpack.c.l.b16 %v96
    %v229 = vunpack.c.l.b16 %v97
    %v230 = vunpack.c.l.b16 %v98
    %v231 = vunpack.c.l.b16 %v99
    %v232 = vpack.c.b16 %v217, %v216
    %v233 = vpack.c.b16 %v219, %v218
    %v234 = vpack.c.b16 %v221, %v220
    %v235 = vpack.c.b16 %v223, %v222
    %v236 = vpack.c.b16 %v225, %v224
    %v237 = vpack.c.b16 %v227, %v226
    %v238 = vpack.c.b16 %v229, %v228
    %v239 = vpack.c.b16 %v231, %v230
    %248 = vmatpush.bf16.msra.mxu0 %v239
    %249 = vmatpush.bf16.msra.mxu0 %v238
    %250 = vmatpush.bf16.msra.mxu0 %v237
    %251 = vmatpush.bf16.msra.mxu0 %v236
    %252 = vmatpush.bf16.msra.mxu0 %v235
    %253 = vmatpush.bf16.msra.mxu0 %v234
    %254 = vmatpush.bf16.msra.mxu0 %v233
    %255 = vmatpush.bf16.msra.mxu0 %v232
    %256 = vmatmul.bf16.gmra.mxu0 %v197
    %v257 = vpop.f32.mrf.mxu0
    %v258 = vadd.f32 %v106, %v257
    %v259 = vpop.f32.mrf.mxu0
    %v260 = vadd.f32 %v106, %v259
    %261 = vdwg.mxu0
    %v262 = vadd.f32 %v258, %v185
    %v263 = vadd.f32 %v260, %v186
    %264 = vst [vmem:[#allocation8] sm:$0xff] %v262
    %265 = vst [vmem:[#allocation8 + $0x8] sm:$0xff] %v263
    %s266 = scalar_lea.vmem [#allocation2], 16
    %v267 = vld [vmem:[%s266] sm:$0xff]
    %v268 = vld [vmem:[%s266 + $0x8] sm:$0xff]
    %v269 = vsub.f32 %v267, %v121
    %v270 = vsub.f32 %v268, %v122
    %v271 = vmul.f32 %v269, 0.5
    %v272 = vmul.f32 %v270, 0.5
    %v273 = vadd.f32 %v121, %v271
    %v274 = vadd.f32 %v122, %v272
    %vm275 = vcmp.ge.f32.partialorder %v273, 1.0
    %vm276 = vcmp.ge.f32.partialorder %v274, 1.0
    %v277 = vsel %vm275, 1, 0
    %v278 = vsel %vm276, 1, 0
    %v279 = vcvt.s32.f32 %v277
    %v280 = vcvt.s32.f32 %v278
    %v281 = vpack.c.bf16 %v280, %v279
    %v282 = vsel %vm275, 0.0, %v273
    %v283 = vsel %vm276, 0.0, %v274
    %284 = vmatpush.bf16.msra.mxu0 %v162
    %285 = vmatpush.bf16.msra.mxu0 %v161
    %286 = vmatpush.bf16.msra.mxu0 %v160
    %287 = vmatpush.bf16.msra.mxu0 %v159
    %288 = vmatpush.bf16.msra.mxu0 %v158
    %289 = vmatpush.bf16.msra.mxu0 %v157
    %290 = vmatpush.bf16.msra.mxu0 %v156
    %291 = vmatpush.bf16.msra.mxu0 %v155
    %292 = vmatmul.bf16.gmra.mxu0 %v281
    %v293 = vpop.f32.mrf.mxu0
    %v294 = vadd.f32 %v102, %v293
    %v295 = vpop.f32.mrf.mxu0
    %v296 = vadd.f32 %v102, %v295
    %297 = vdwg.mxu0
    %v298 = vadd.f32 %v267, %v294
    %v299 = vadd.f32 %v268, %v296
    %v300 = vsub.f32 %v298, %v198
    %v301 = vsub.f32 %v299, %v199
    %v302 = vmul.f32 %v300, 0.5
    %v303 = vmul.f32 %v301, 0.5
    %v304 = vadd.f32 %v198, %v302
    %v305 = vadd.f32 %v199, %v303
    %vm306 = vcmp.ge.f32.partialorder %v304, 1.0
    %vm307 = vcmp.ge.f32.partialorder %v305, 1.0
    %v308 = vsel %vm306, 1, 0
    %v309 = vsel %vm307, 1, 0
    %v310 = vcvt.s32.f32 %v308
    %v311 = vcvt.s32.f32 %v309
    %v312 = vpack.c.bf16 %v311, %v310
    %v313 = vsel %vm306, 0.0, %v304
    %v314 = vsel %vm307, 0.0, %v305
    %315 = vmatpush.bf16.msra.mxu0 %v239
    %316 = vmatpush.bf16.msra.mxu0 %v238
    %317 = vmatpush.bf16.msra.mxu0 %v237
    %318 = vmatpush.bf16.msra.mxu0 %v236
    %319 = vmatpush.bf16.msra.mxu0 %v235
    %320 = vmatpush.bf16.msra.mxu0 %v234
    %321 = vmatpush.bf16.msra.mxu0 %v233
    %322 = vmatpush.bf16.msra.mxu0 %v232
    %323 = vmatmul.bf16.gmra.mxu0 %v312
    %v324 = vpop.f32.mrf.mxu0
    %v325 = vadd.f32 %v106, %v324
    %v326 = vpop.f32.mrf.mxu0
    %v327 = vadd.f32 %v106, %v326
    %328 = vdwg.mxu0
    %v329 = vadd.f32 %v325, %v298
    %v330 = vadd.f32 %v327, %v299
    %s331 = scalar_lea.vmem [#allocation8], 16
    %332 = vst [vmem:[%s331] sm:$0xff] %v329
    %333 = vst [vmem:[%s331 + $0x8] sm:$0xff] %v330
    %s334 = scalar_lea.vmem [#allocation2], 32
    %v335 = vld [vmem:[%s334] sm:$0xff]
    %v336 = vld [vmem:[%s334 + $0x8] sm:$0xff]
    %v337 = vsub.f32 %v335, %v282
    %v338 = vsub.f32 %v336, %v283
    %v339 = vmul.f32 %v337, 0.5
    %v340 = vmul.f32 %v338, 0.5
    %v341 = vadd.f32 %v282, %v339
    %v342 = vadd.f32 %v283, %v340
    %vm343 = vcmp.ge.f32.partialorder %v341, 1.0
    %vm344 = vcmp.ge.f32.partialorder %v342, 1.0
    %v345 = vsel %vm343, 1, 0
    %v346 = vsel %vm344, 1, 0
    %v347 = vcvt.s32.f32 %v345
    %v348 = vcvt.s32.f32 %v346
    %v349 = vpack.c.bf16 %v348, %v347
    %v350 = vsel %vm343, 0.0, %v341
    %v351 = vsel %vm344, 0.0, %v342
    %352 = vmatpush.bf16.msra.mxu0 %v162
    %353 = vmatpush.bf16.msra.mxu0 %v161
    %354 = vmatpush.bf16.msra.mxu0 %v160
    %355 = vmatpush.bf16.msra.mxu0 %v159
    %356 = vmatpush.bf16.msra.mxu0 %v158
    %357 = vmatpush.bf16.msra.mxu0 %v157
    %358 = vmatpush.bf16.msra.mxu0 %v156
    %359 = vmatpush.bf16.msra.mxu0 %v155
    %360 = vmatmul.bf16.gmra.mxu0 %v349
    %v361 = vpop.f32.mrf.mxu0
    %v362 = vadd.f32 %v102, %v361
    %v363 = vpop.f32.mrf.mxu0
    %v364 = vadd.f32 %v102, %v363
    %365 = vdwg.mxu0
    %v366 = vadd.f32 %v335, %v362
    %v367 = vadd.f32 %v336, %v364
    %v368 = vsub.f32 %v366, %v313
    %v369 = vsub.f32 %v367, %v314
    %v370 = vmul.f32 %v368, 0.5
    %v371 = vmul.f32 %v369, 0.5
    %v372 = vadd.f32 %v313, %v370
    %v373 = vadd.f32 %v314, %v371
    %vm374 = vcmp.ge.f32.partialorder %v372, 1.0
    %vm375 = vcmp.ge.f32.partialorder %v373, 1.0
    %v376 = vsel %vm374, 1, 0
    %v377 = vsel %vm375, 1, 0
    %v378 = vcvt.s32.f32 %v376
    %v379 = vcvt.s32.f32 %v377
    %v380 = vpack.c.bf16 %v379, %v378
    %v381 = vsel %vm374, 0.0, %v372
    %v382 = vsel %vm375, 0.0, %v373
    %383 = vmatpush.bf16.msra.mxu0 %v239
    %384 = vmatpush.bf16.msra.mxu0 %v238
    %385 = vmatpush.bf16.msra.mxu0 %v237
    %386 = vmatpush.bf16.msra.mxu0 %v236
    %387 = vmatpush.bf16.msra.mxu0 %v235
    %388 = vmatpush.bf16.msra.mxu0 %v234
    %389 = vmatpush.bf16.msra.mxu0 %v233
    %390 = vmatpush.bf16.msra.mxu0 %v232
    %391 = vmatmul.bf16.gmra.mxu0 %v380
    %v392 = vpop.f32.mrf.mxu0
    %v393 = vadd.f32 %v106, %v392
    %v394 = vpop.f32.mrf.mxu0
    %v395 = vadd.f32 %v106, %v394
    %396 = vdwg.mxu0
    %v397 = vadd.f32 %v393, %v366
    %v398 = vadd.f32 %v395, %v367
    %s399 = scalar_lea.vmem [#allocation8], 32
    %400 = vst [vmem:[%s399] sm:$0xff] %v397
    %401 = vst [vmem:[%s399 + $0x8] sm:$0xff] %v398
    %s402 = scalar_lea.vmem [#allocation2], 48
    %v403 = vld [vmem:[%s402] sm:$0xff]
    %v404 = vld [vmem:[%s402 + $0x8] sm:$0xff]
    %v405 = vsub.f32 %v403, %v350
    %v406 = vsub.f32 %v404, %v351
    %v407 = vmul.f32 %v405, 0.5
    %v408 = vmul.f32 %v406, 0.5
    %v409 = vadd.f32 %v350, %v407
    %v410 = vadd.f32 %v351, %v408
    %vm411 = vcmp.ge.f32.partialorder %v409, 1.0
    %vm412 = vcmp.ge.f32.partialorder %v410, 1.0
    %v413 = vsel %vm411, 1, 0
    %v414 = vsel %vm412, 1, 0
    %v415 = vcvt.s32.f32 %v413
    %v416 = vcvt.s32.f32 %v414
    %v417 = vpack.c.bf16 %v416, %v415
    %418 = vmatpush.bf16.msra.mxu0 %v162
    %419 = vmatpush.bf16.msra.mxu0 %v161
    %420 = vmatpush.bf16.msra.mxu0 %v160
    %421 = vmatpush.bf16.msra.mxu0 %v159
    %422 = vmatpush.bf16.msra.mxu0 %v158
    %423 = vmatpush.bf16.msra.mxu0 %v157
    %424 = vmatpush.bf16.msra.mxu0 %v156
    %425 = vmatpush.bf16.msra.mxu0 %v155
    %426 = vmatmul.bf16.gmra.mxu0 %v417
    %v427 = vpop.f32.mrf.mxu0
    %v428 = vadd.f32 %v102, %v427
    %v429 = vpop.f32.mrf.mxu0
    %v430 = vadd.f32 %v102, %v429
    %431 = vdwg.mxu0
    %v432 = vadd.f32 %v403, %v428
    %v433 = vadd.f32 %v404, %v430
    %v434 = vsub.f32 %v432, %v381
    %v435 = vsub.f32 %v433, %v382
    %v436 = vmul.f32 %v434, 0.5
    %v437 = vmul.f32 %v435, 0.5
    %v438 = vadd.f32 %v381, %v436
    %v439 = vadd.f32 %v382, %v437
    %vm440 = vcmp.ge.f32.partialorder %v438, 1.0
    %vm441 = vcmp.ge.f32.partialorder %v439, 1.0
    %v442 = vsel %vm440, 1, 0
    %v443 = vsel %vm441, 1, 0
    %v444 = vcvt.s32.f32 %v442
    %v445 = vcvt.s32.f32 %v443
    %v446 = vpack.c.bf16 %v445, %v444
    %447 = vmatpush.bf16.msra.mxu0 %v239
    %448 = vmatpush.bf16.msra.mxu0 %v238
    %449 = vmatpush.bf16.msra.mxu0 %v237
    %450 = vmatpush.bf16.msra.mxu0 %v236
    %451 = vmatpush.bf16.msra.mxu0 %v235
    %452 = vmatpush.bf16.msra.mxu0 %v234
    %453 = vmatpush.bf16.msra.mxu0 %v233
    %454 = vmatpush.bf16.msra.mxu0 %v232
    %455 = vmatmul.bf16.gmra.mxu0 %v446
    %v456 = vpop.f32.mrf.mxu0
    %v457 = vadd.f32 %v106, %v456
    %v458 = vpop.f32.mrf.mxu0
    %v459 = vadd.f32 %v106, %v458
    %460 = vdwg.mxu0
    %v461 = vadd.f32 %v457, %v432
    %v462 = vadd.f32 %v459, %v433
    %s463 = scalar_lea.vmem [#allocation8], 48
    %464 = vst [vmem:[%s463] sm:$0xff] %v461
    %465 = vst [vmem:[%s463 + $0x8] sm:$0xff] %v462
    // Predicated region
    $region34: #{tpu_custom_call.1} parent=1 // pred_check
      _
    $region35: #{tpu_custom_call.1} parent=1 // pred_check_branch
      %467 = sbr.rel (0) target = $region37
    $region36: #{tpu_custom_call.1} parent=1 // pred_region
      %469 = vsyncadd [#allocation4], 0
      %s470 = sshll.u32 [#allocation8], 4
      %s471 = int_to_ptr.vmem [resolvable:$true] %s470
      %s472 = sshll.u32 %s5, 4
      %s473 = int_to_ptr.hbm [resolvable:$true] %s472
      %478 = dma.vmem_to_hbm [thread:$0]  %s471, 1024, %s473, [#allocation4], 128, 128, 8
    $region37: #{tpu_custom_call.1} parent=1 // pred_fallthru
      _
    // Predicated region
    $region38: #{tpu_custom_call.1} parent=1 // pred_check
      _
    $region39: #{tpu_custom_call.1} parent=1 // pred_check_branch
      %480 = sbr.rel (0) target = $region41
    $region40: #{tpu_custom_call.1} parent=1 // pred_region
      %482 = dma.done [#allocation4], 1024
    $region41: #{tpu_custom_call.1} parent=1 // pred_fallthru
      _
    %483 = vsyncpa [#allocation3], 1
    %484 = vsyncpa [#allocation6], 1
    %485 = vsyncpa [#allocation4], 1

</llo_original>
